<compile_context>
chip_gen: v7x
topology: tpu7x:2x2x1
jax: 0.10.0
libtpu: 0.0.40
codegen_flags: <defaults>
</compile_context>

<pallas_src>
import math
import functools

import jax
import jax.numpy as jnp
from jax.experimental import pallas as pl
from jax.experimental.pallas import tpu as pltpu


def _round_up(x, m):
    return (x + m - 1) // m * m


def _tiles(in_features, out_features, block_n, block_k):
    assert block_n % 128 == 0 and block_k % 128 == 0, "block sizes must be multiples of 128"
    tk = min(block_k, _round_up(in_features, 128))
    tn = min(block_n, _round_up(out_features, 128))
    Kp = _round_up(in_features, tk)
    Np = _round_up(out_features, tn)
    return tk, tn, Kp, Np


def prepare_noisy_linear_weights(weight_mu_t, weight_sigma_t, *,
                                 block_n=1024, block_k=1024, dtype=jnp.bfloat16):
    """Pad + cast the (in, out) weight tensors once; cache the result across calls."""
    in_features, out_features = weight_mu_t.shape
    _, _, Kp, Np = _tiles(in_features, out_features, block_n, block_k)
    pad = ((0, Kp - in_features), (0, Np - out_features))
    return (jnp.pad(weight_mu_t.astype(dtype), pad),
            jnp.pad(weight_sigma_t.astype(dtype), pad))


def _noisy_linear_kernel(x_ref, wmu_ref, wsig_ref, ein_ref, eout_ref, bias_ref,
                         o_ref, *, tk):
    """grid = (batch tiles, out-feature tiles, in-feature tiles); axis 2 is K."""
    k = pl.program_id(2)

    @pl.when(k == 0)
    def _():
        # Initialize the resident f32 output block with the precombined bias.
        o_ref[...] = jnp.broadcast_to(bias_ref[...], o_ref.shape).astype(o_ref.dtype)

    off = pl.multiple_of(k * tk, 128)
    x = x_ref[:, pl.ds(off, tk)]            # (tb, tk) bf16, VMEM-resident slab
    ein = ein_ref[:, pl.ds(off, tk)]        # (1, tk)  f32

    # mu path: x @ Wmu  (weights already (in, out) -> MXU-direct, lane-dense store)
    o_ref[...] += jnp.dot(x, wmu_ref[...], preferred_element_type=jnp.float32)
    # factorised sigma path: eps_out * ((x * eps_in) @ Wsig)
    xe = (x.astype(jnp.float32) * ein).astype(wsig_ref.dtype)
    o_ref[...] += (jnp.dot(xe, wsig_ref[...], preferred_element_type=jnp.float32)
                   * eout_ref[...])


@functools.partial(jax.jit, static_argnames=("block_n", "block_k", "training"))
def noisy_linear(x, weight_mu_p, weight_sigma_p, eps_in, eps_out,
                 bias_mu, bias_sigma, *, block_n=1024, block_k=1024, training=True):
    """NoisyLinear forward.

    weight_mu_p / weight_sigma_p : pre-padded (Kp, Np) bf16 arrays from
        prepare_noisy_linear_weights (same block_n / block_k).
    eps_in : (in_features,)   eps_out : (out_features,)   bias_* : (out_features,)
    x : (..., in_features)  ->  (..., out_features)   (f32 output)
    """
    in_features = x.shape[-1]
    out_features = bias_mu.shape[0]
    assert x.ndim >= 2
    assert eps_in.shape == (in_features,) and eps_out.shape == (out_features,)

    tk, tn, Kp, Np = _tiles(in_features, out_features, block_n, block_k)
    assert weight_mu_p.shape == (Kp, Np) and weight_sigma_p.shape == (Kp, Np), (
        "weights must come from prepare_noisy_linear_weights with the same block sizes")

    lead = x.shape[:-1]
    x2 = x.reshape(-1, in_features)
    B = x2.shape[0]

    # Batch tiling: keep the whole (tb, Kp) activation slab resident in VMEM.
    Bp0 = _round_up(B, 8)
    tb = min(Bp0, 256)
    x_budget = 16 * 1024 * 1024                       # cap resident-x footprint
    tb_cap = max(8, (x_budget // (Kp * 2 * 2)) // 8 * 8)
    tb = min(tb, tb_cap)
    Bp = _round_up(B, tb)
    nb = Bp // tb

    # v7x: if both parallel axes would collapse to a single step, split N so
    # both TensorCores get work (neutral on v5e/v6e).
    if nb == 1 and Np // tn == 1:
        m = Np // 128
        if m >= 2:
            for cand in range((m + 1) // 2, 0, -1):
                if m % cand == 0:
                    tn = 128 * cand
                    break
    nj = Np // tn
    nk = Kp // tk

    if training:
        ein = eps_in.astype(jnp.float32)
        eout = eps_out.astype(jnp.float32)
        bias = bias_mu.astype(jnp.float32) + bias_sigma.astype(jnp.float32) * eout
    else:
        # mu-only forward: zero eps kills the sigma path exactly.
        ein = jnp.zeros((in_features,), jnp.float32)
        eout = jnp.zeros((out_features,), jnp.float32)
        bias = bias_mu.astype(jnp.float32)

    xP = jnp.pad(x2.astype(jnp.bfloat16), ((0, Bp - B), (0, Kp - in_features)))
    einP = jnp.pad(ein.reshape(1, -1), ((0, 0), (0, Kp - in_features)))
    eoutP = jnp.pad(eout.reshape(1, -1), ((0, 0), (0, Np - out_features)))
    biasP = jnp.pad(bias.reshape(1, -1), ((0, 0), (0, Np - out_features)))

    grid = (nb, nj, nk)

    # VMEM footprint: double-buffered weight streams + resident x + output + aux,
    # with headroom, capped below v7x's 64 MiB physical VMEM.
    est = (2 * 2 * tk * tn * 2            # wmu + wsig, 2 buffers each, bf16
           + 2 * tb * Kp * 2              # resident x slab (double-buffer alloc)
           + 2 * 8 * Kp * 4               # eps_in (sublane-padded)
           + 2 * 2 * 8 * tn * 4           # eps_out + bias
           + 2 * tb * tn * 4)             # f32 output / accumulator
    vmem_limit = int(min(int(1.5 * est) + (2 << 20), 56 * 1024 * 1024))

    cost = pl.CostEstimate(
        flops=2 * 2 * Bp * Kp * Np,                         # two matmuls
        transcendentals=0,
        bytes_accessed=int(nb * 2 * Kp * Np * 2 + Bp * Kp * 2 + Bp * Np * 4
                           + 4 * (Kp + 2 * Np)),
    )

    out = pl.pallas_call(
        functools.partial(_noisy_linear_kernel, tk=tk),
        out_shape=jax.ShapeDtypeStruct((Bp, Np), jnp.float32),
        grid=grid,
        in_specs=[
            pl.BlockSpec((tb, Kp), lambda b, j, k: (b, 0)),   # x (resident per b tile)
            pl.BlockSpec((tk, tn), lambda b, j, k: (k, j)),   # weight_mu   (in, out) bf16
            pl.BlockSpec((tk, tn), lambda b, j, k: (k, j)),   # weight_sigma(in, out) bf16
            pl.BlockSpec((1, Kp),  lambda b, j, k: (0, 0)),   # eps_in (resident)
            pl.BlockSpec((1, tn),  lambda b, j, k: (0, j)),   # eps_out
            pl.BlockSpec((1, tn),  lambda b, j, k: (0, j)),   # bias = bias_mu + bias_sigma*eps_out
        ],
        out_specs=pl.BlockSpec((tb, tn), lambda b, j, k: (b, j)),
        compiler_params=pltpu.CompilerParams(
            dimension_semantics=("parallel", "parallel", "arbitrary"),
            vmem_limit_bytes=vmem_limit,
        ),
        cost_estimate=cost,
    )(xP, weight_mu_p, weight_sigma_p, einP, eoutP, biasP)

    return out[:B, :out_features].reshape(*lead, out_features)


def _scale_noise(key, size):
    # x.sign() * sqrt(|x|) of standard normal noise
    x = jax.random.normal(key, (size,), dtype=jnp.float32)
    return jnp.sign(x) * jnp.sqrt(jnp.abs(x))


def init_noisy_linear_params(key, in_features, out_features, std_init=0.5):
    """Parameters in the kernel-friendly (in, out) layout + factorised noise."""
    k_wmu, k_bmu, k_ein, k_eout = jax.random.split(key, 4)
    mu_range = 1.0 / math.sqrt(in_features)

    weight_mu_t = jax.random.uniform(
        k_wmu, (in_features, out_features), jnp.float32, -mu_range, mu_range)
    weight_sigma_t = jnp.full((in_features, out_features),
                              std_init / math.sqrt(in_features), jnp.float32)
    bias_mu = jax.random.uniform(
        k_bmu, (out_features,), jnp.float32, -mu_range, mu_range)
    bias_sigma = jnp.full((out_features,),
                          std_init / math.sqrt(out_features), jnp.float32)

    eps_in = _scale_noise(k_ein, in_features)
    eps_out = _scale_noise(k_eout, out_features)

    return dict(weight_mu_t=weight_mu_t, weight_sigma_t=weight_sigma_t,
                bias_mu=bias_mu, bias_sigma=bias_sigma,
                eps_in=eps_in, eps_out=eps_out)


if __name__ == "__main__":
    in_features, out_features, batch = 32, 64, 8

    key = jax.random.PRNGKey(0)
    k_params, k_x = jax.random.split(key)
    params = init_noisy_linear_params(k_params, in_features, out_features)

    # Pad + cast weights ONCE (would be cached alongside the module's params).
    wmu_p, wsig_p = prepare_noisy_linear_weights(
        params["weight_mu_t"], params["weight_sigma_t"])

    x = jax.random.normal(k_x, (batch, in_features), dtype=jnp.float32)

    # Training-mode forward.
    out = noisy_linear(x, wmu_p, wsig_p,
                       params["eps_in"], params["eps_out"],
                       params["bias_mu"], params["bias_sigma"], training=True)
    out = jax.block_until_ready(out)
    assert out.shape == (batch, out_features)

    # Reference (training-mode PyTorch semantics, f32):
    #   weight = weight_mu + weight_sigma * outer(eps_out, eps_in)
    #   bias   = bias_mu   + bias_sigma   * eps_out
    #   out    = x @ weight.T + bias
    w_t = params["weight_mu_t"] + params["weight_sigma_t"] * jnp.outer(
        params["eps_in"], params["eps_out"])
    b = params["bias_mu"] + params["bias_sigma"] * params["eps_out"]
    ref = x @ w_t + b
    err = float(jnp.max(jnp.abs(out - ref)))
    assert jnp.allclose(out, ref, atol=5e-2, rtol=5e-2), err  # bf16 streams, f32 acc

    # Eval-mode forward (mu-only linear).
    out_eval = noisy_linear(x, wmu_p, wsig_p,
                            params["eps_in"], params["eps_out"],
                            params["bias_mu"], params["bias_sigma"], training=False)
    out_eval = jax.block_until_ready(out_eval)
    ref_eval = x @ params["weight_mu_t"] + params["bias_mu"]
    assert jnp.allclose(out_eval, ref_eval, atol=5e-2, rtol=5e-2), \
        float(jnp.max(jnp.abs(out_eval - ref_eval)))

    print("KERNEL_OK")
</pallas_src>

<mosaic_0001>
module attributes {stable_mosaic.version = 11 : i64} {
  func.func @_noisy_linear_kernel(%arg0: i32, %arg1: i32, %arg2: i32, %arg3: memref<8x128xbf16, #tpu.memory_space<vmem>>, %arg4: memref<128x128xbf16, #tpu.memory_space<vmem>>, %arg5: memref<128x128xbf16, #tpu.memory_space<vmem>>, %arg6: memref<1x128xf32, #tpu.memory_space<vmem>>, %arg7: memref<1x128xf32, #tpu.memory_space<vmem>>, %arg8: memref<1x128xf32, #tpu.memory_space<vmem>>, %arg9: memref<8x128xf32, #tpu.memory_space<vmem>>) attributes {dimension_semantics = [#tpu.dimension_semantics<parallel>, #tpu.dimension_semantics<parallel>, #tpu.dimension_semantics<arbitrary>], iteration_bounds = array<i64: 1, 1, 1>, scalar_prefetch = 0 : i64, scratch_operands = 0 : i64, tpu.core_type = #tpu.core_type<tc>, window_params = [{transform_indices = @transform_0, window_bounds = array<i64: 8, 128>}, {transform_indices = @transform_1, window_bounds = array<i64: 128, 128>}, {transform_indices = @transform_2, window_bounds = array<i64: 128, 128>}, {pipeline_mode = #tpu.pipeline_mode<synchronous>, transform_indices = @transform_3, window_bounds = array<i64: 1, 128>}, {transform_indices = @transform_4, window_bounds = array<i64: 1, 128>}, {transform_indices = @transform_5, window_bounds = array<i64: 1, 128>}, {transform_indices = @transform_6, window_bounds = array<i64: 8, 128>}]} {
    %c0_i32 = arith.constant 0 : i32
    %0 = arith.cmpi eq, %arg2, %c0_i32 : i32
    %1 = arith.extui %0 : i1 to i32
    %c0_i32_0 = arith.constant 0 : i32
    %2 = arith.cmpi ne, %1, %c0_i32_0 : i32
    scf.if %2 {
      %c0_17 = arith.constant 0 : index
      %c0_18 = arith.constant 0 : index
      %26 = vector.load %arg8[%c0_17, %c0_18] : memref<1x128xf32, #tpu.memory_space<vmem>>, vector<1x128xf32>
      %27 = vector.shape_cast %26 : vector<1x128xf32> to vector<1x128xf32>
      %28 = vector.broadcast %27 : vector<1x128xf32> to vector<8x128xf32>
      %c0_19 = arith.constant 0 : index
      %c0_20 = arith.constant 0 : index
      %29 = vector.load %arg9[%c0_19, %c0_20] : memref<8x128xf32, #tpu.memory_space<vmem>>, vector<8x128xf32>
      tpu.vector_store %arg9[%c0_19, %c0_20], %28 {strides = array<i32>} : memref<8x128xf32, #tpu.memory_space<vmem>>, vector<8x128xf32>,
    } else {
    }
    %c128_i32 = arith.constant 128 : i32
    %3 = arith.muli %arg2, %c128_i32 : i32
    %4 = tpu.assume_multiple %3, 128 : i32
    %c0 = arith.constant 0 : index
    %5 = arith.index_cast %4 : i32 to index
    %6 = vector.load %arg3[%c0, %5] : memref<8x128xbf16, #tpu.memory_space<vmem>>, vector<8x128xbf16>
    %c0_1 = arith.constant 0 : index
    %7 = arith.index_cast %4 : i32 to index
    %8 = vector.load %arg6[%c0_1, %7] : memref<1x128xf32, #tpu.memory_space<vmem>>, vector<1x128xf32>
    %c0_2 = arith.constant 0 : index
    %c0_3 = arith.constant 0 : index
    %9 = vector.load %arg9[%c0_2, %c0_3] : memref<8x128xf32, #tpu.memory_space<vmem>>, vector<8x128xf32>
    %c0_4 = arith.constant 0 : index
    %c0_5 = arith.constant 0 : index
    %10 = vector.load %arg4[%c0_4, %c0_5] : memref<128x128xbf16, #tpu.memory_space<vmem>>, vector<128x128xbf16>
    %cst = arith.constant dense<0.000000e+00> : vector<8x128xf32>
    %11 = tpu.matmul %6, %10, %cst {dimension_numbers = #tpu.dot_dimension_numbers<[1], [0], [0], [1], [0, 0, 1, 1], [], []>} : vector<8x128xbf16>, vector<128x128xbf16>, vector<8x128xf32> -> vector<8x128xf32>
    %12 = arith.addf %9, %11 : vector<8x128xf32>
    %c0_6 = arith.constant 0 : index
    %c0_7 = arith.constant 0 : index
    %13 = vector.load %arg9[%c0_6, %c0_7] : memref<8x128xf32, #tpu.memory_space<vmem>>, vector<8x128xf32>
    tpu.vector_store %arg9[%c0_6, %c0_7], %12 {strides = array<i32>} : memref<8x128xf32, #tpu.memory_space<vmem>>, vector<8x128xf32>,
    %14 = arith.extf %6 : vector<8x128xbf16> to vector<8x128xf32>
    %15 = vector.broadcast %8 : vector<1x128xf32> to vector<8x128xf32>
    %16 = arith.mulf %14, %15 : vector<8x128xf32>
    %17 = arith.truncf %16 : vector<8x128xf32> to vector<8x128xbf16>
    %c0_8 = arith.constant 0 : index
    %c0_9 = arith.constant 0 : index
    %18 = vector.load %arg9[%c0_8, %c0_9] : memref<8x128xf32, #tpu.memory_space<vmem>>, vector<8x128xf32>
    %c0_10 = arith.constant 0 : index
    %c0_11 = arith.constant 0 : index
    %19 = vector.load %arg5[%c0_10, %c0_11] : memref<128x128xbf16, #tpu.memory_space<vmem>>, vector<128x128xbf16>
    %cst_12 = arith.constant dense<0.000000e+00> : vector<8x128xf32>
    %20 = tpu.matmul %17, %19, %cst_12 {dimension_numbers = #tpu.dot_dimension_numbers<[1], [0], [0], [1], [0, 0, 1, 1], [], []>} : vector<8x128xbf16>, vector<128x128xbf16>, vector<8x128xf32> -> vector<8x128xf32>
    %c0_13 = arith.constant 0 : index
    %c0_14 = arith.constant 0 : index
    %21 = vector.load %arg7[%c0_13, %c0_14] : memref<1x128xf32, #tpu.memory_space<vmem>>, vector<1x128xf32>
    %22 = vector.broadcast %21 : vector<1x128xf32> to vector<8x128xf32>
    %23 = arith.mulf %20, %22 : vector<8x128xf32>
    %24 = arith.addf %18, %23 : vector<8x128xf32>
    %c0_15 = arith.constant 0 : index
    %c0_16 = arith.constant 0 : index
    %25 = vector.load %arg9[%c0_15, %c0_16] : memref<8x128xf32, #tpu.memory_space<vmem>>, vector<8x128xf32>
    tpu.vector_store %arg9[%c0_15, %c0_16], %24 {strides = array<i32>} : memref<8x128xf32, #tpu.memory_space<vmem>>, vector<8x128xf32>,
    return
  }
  func.func @transform_0(%arg0: i32, %arg1: i32, %arg2: i32) -> (i32, i32) {
    %c0_i32 = arith.constant 0 : i32
    %c0_i32_0 = arith.constant 0 : i32
    return %arg0, %c0_i32 : i32, i32
  }
  func.func @transform_1(%arg0: i32, %arg1: i32, %arg2: i32) -> (i32, i32) {
    %c0_i32 = arith.constant 0 : i32
    return %arg2, %arg1 : i32, i32
  }
  func.func @transform_2(%arg0: i32, %arg1: i32, %arg2: i32) -> (i32, i32) {
    %c0_i32 = arith.constant 0 : i32
    return %arg2, %arg1 : i32, i32
  }
  func.func @transform_3(%arg0: i32, %arg1: i32, %arg2: i32) -> (i32, i32) {
    %c0_i32 = arith.constant 0 : i32
    %c0_i32_0 = arith.constant 0 : i32
    %c0_i32_1 = arith.constant 0 : i32
    return %c0_i32, %c0_i32_0 : i32, i32
  }
  func.func @transform_4(%arg0: i32, %arg1: i32, %arg2: i32) -> (i32, i32) {
    %c0_i32 = arith.constant 0 : i32
    %c0_i32_0 = arith.constant 0 : i32
    return %c0_i32, %arg1 : i32, i32
  }
  func.func @transform_5(%arg0: i32, %arg1: i32, %arg2: i32) -> (i32, i32) {
    %c0_i32 = arith.constant 0 : i32
    %c0_i32_0 = arith.constant 0 : i32
    return %c0_i32, %arg1 : i32, i32
  }
  func.func @transform_6(%arg0: i32, %arg1: i32, %arg2: i32) -> (i32, i32) {
    %c0_i32 = arith.constant 0 : i32
    return %arg0, %arg1 : i32, i32
  }
}

</mosaic_0001>

<llo_original>
// kernel: noisy_linear.1
$region0: #{noisy_linear.1}
  #allocation0 [shape = 'u32[]', space=smem, size = 0x4, offset = 0x4, fixed_abs, tag = 'smem constant byte address 0x4 - core index']
  #allocation1 [shape = 'u32[144,128]{1,0:T(1,128)}', space=vmem, size = 0x12000, scoped, tag = 'internal scratch']
  %s0 = inlined_call_operand.vmem [shape: bf16[8,128], index: 0, kind: input, shape index: {}]
  %s1 = inlined_call_operand.hbm [shape: bf16[128,128], index: 1, kind: input, shape index: {}]
  %s2 = inlined_call_operand.hbm [shape: bf16[128,128], index: 2, kind: input, shape index: {}]
  %s3 = inlined_call_operand.vmem [shape: f32[1,128], index: 3, kind: input, shape index: {}]
  %s4 = inlined_call_operand.vmem [shape: f32[1,128], index: 4, kind: input, shape index: {}]
  %s5 = inlined_call_operand.vmem [shape: f32[1,128], index: 5, kind: input, shape index: {}]
  %s6 = inlined_call_operand.hbm [shape: f32[8,128], index: 6, kind: output, shape index: {}]
  %s7 = sld [smem:[#allocation0]]
  $region46: #{noisy_linear.1} parent=0
    _
  %s9 = ssub.s32 1, %s7
  %s10 = scalar_select 0, %s9, %s7
  $region1: #{noisy_linear.1} parent=0
    #allocation2 [shape = 'u8[32768]{0}', space=vmem, size = 0x8000, scoped, tag = 'input window, operand 1, single buffered']
    #allocation3 [shape = 's32[1]{0}', space=sflag, size = 0x4, scoped, tag = 'scoped memory for noisy_linear.1']
    #allocation4 [shape = 's32[1]{0}', space=sflag, size = 0x4, scoped, tag = 'scoped memory for noisy_linear.1']
    #allocation5 [shape = 'u8[32768]{0}', space=vmem, size = 0x8000, scoped, tag = 'input window, operand 2, single buffered']
    #allocation6 [shape = 's32[1]{0}', space=sflag, size = 0x4, scoped, tag = 'scoped memory for noisy_linear.1']
    #allocation7 [shape = 'u8[4096]{0}', space=vmem, size = 0x1000, scoped, tag = 'output window, operand 0, single buffered']
    %11 = vsyncpa [#allocation3], 0
    %12 = vsyncpa [#allocation6], 0
    %13 = vsyncpa [#allocation4], 0
    // Predicated region
    $region2: #{noisy_linear.1} parent=1 // pred_check
      _
    $region3: #{noisy_linear.1} parent=1 // pred_check_branch
      %15 = sbr.rel (0) target = $region5
    $region4: #{noisy_linear.1} parent=1 // pred_region
      _
    $region5: #{noisy_linear.1} parent=1 // pred_fallthru
      _
    // Predicated region
    $region6: #{noisy_linear.1} parent=1 // pred_check
      _
    $region7: #{noisy_linear.1} parent=1 // pred_check_branch
      %17 = sbr.rel (0) target = $region9
    $region8: #{noisy_linear.1} parent=1 // pred_region
      %s19 = ssub.s32 1024, 1024
      %20 = vsyncadd [#allocation3], %s19
      %s21 = sshll.u32 [#allocation2], 4
      %s22 = int_to_ptr.vmem [resolvable:$true] %s21
      %27 = dma.hbm_to_vmem [thread:$0]  %s1, 1024, %s22, [#allocation3], 64, 64, 4
    $region9: #{noisy_linear.1} parent=1 // pred_fallthru
      _
    // Predicated region
    $region10: #{noisy_linear.1} parent=1 // pred_check
      _
    $region11: #{noisy_linear.1} parent=1 // pred_check_branch
      %29 = sbr.rel (0) target = $region13
    $region12: #{noisy_linear.1} parent=1 // pred_region
      %s31 = ssub.s32 1024, 1024
      %32 = vsyncadd [#allocation6], %s31
      %s33 = sshll.u32 [#allocation5], 4
      %s34 = int_to_ptr.vmem [resolvable:$true] %s33
      %39 = dma.hbm_to_vmem [thread:$0]  %s2, 1024, %s34, [#allocation6], 64, 64, 4
    $region13: #{noisy_linear.1} parent=1 // pred_fallthru
      _
    // Predicated region
    $region14: #{noisy_linear.1} parent=1 // pred_check
      _
    $region15: #{noisy_linear.1} parent=1 // pred_check_branch
      %41 = sbr.rel (0) target = $region17
    $region16: #{noisy_linear.1} parent=1 // pred_region
      _
    $region17: #{noisy_linear.1} parent=1 // pred_fallthru
      _
    // Predicated region
    $region18: #{noisy_linear.1} parent=1 // pred_check
      _
    $region19: #{noisy_linear.1} parent=1 // pred_check_branch
      %43 = sbr.rel (0) target = $region21
    $region20: #{noisy_linear.1} parent=1 // pred_region
      _
    $region21: #{noisy_linear.1} parent=1 // pred_fallthru
      _
    // Predicated region
    $region22: #{noisy_linear.1} parent=1 // pred_check
      _
    $region23: #{noisy_linear.1} parent=1 // pred_check_branch
      %45 = sbr.rel (0) target = $region25
    $region24: #{noisy_linear.1} parent=1 // pred_region
      _
    $region25: #{noisy_linear.1} parent=1 // pred_fallthru
      _
    // Predicated region
    $region26: #{noisy_linear.1} parent=1 // pred_check
      _
    $region27: #{noisy_linear.1} parent=1 // pred_check_branch
      %47 = sbr.rel (0) target = $region29
    $region28: #{noisy_linear.1} parent=1 // pred_region
      %48 = dma.done [#allocation3], 1024
    $region29: #{noisy_linear.1} parent=1 // pred_fallthru
      _
    // Predicated region
    $region30: #{noisy_linear.1} parent=1 // pred_check
      _
    $region31: #{noisy_linear.1} parent=1 // pred_check_branch
      %50 = sbr.rel (0) target = $region33
    $region32: #{noisy_linear.1} parent=1 // pred_region
      %51 = dma.done [#allocation6], 1024
    $region33: #{noisy_linear.1} parent=1 // pred_fallthru
      _
    %p53 = scmp.eq.s32.totalorder 0, 0
    // Predicated region
    $region34: #{noisy_linear.1} parent=1 // pred_check
      %p54 = pneg %p53
    $region35: #{noisy_linear.1} parent=1 // pred_check_branch
      %56 = sbr.rel (%p54) target = $region37
    $region36: #{noisy_linear.1} parent=1 // pred_region
      %v57 = vld [vmem:[%s5] sm:$0x1]
      %v59 = vlaneseq
      %v60 = vshrl.u32 %v59, 7
      %v61 = vsub.s32 0, %v60
      %v62 = vrot.slane %v57, %v61
      %64 = vst [vmem:[#allocation7] sm:$0xff] %v62
    $region37: #{noisy_linear.1} parent=1 // pred_fallthru
      _
    %s65 = smul.u32 0, 128
    %s66 = sshra.s32 %s65, 7
    %s67 = sand.u32 %s65, 127
    %s68 = smul.addr %s66, 4
    %s69 = scalar_lea.vmem %s0, %s68
    %v70 = vld [vmem:[%s69] sm:$0xf]
    %s71 = scalar_lea.vmem %s3, %s66
    %v72 = vld [vmem:[%s71] sm:$0x1]
    %v73 = vld [vmem:[#allocation7] sm:$0xff]
    %v74 = vld [vmem:[#allocation2] sm:$0xf]
    %v75 = vld [vmem:[#allocation2 + $0x4] sm:$0xf]
    %v76 = vld [vmem:[#allocation2 + $0x8] sm:$0xf]
    %v77 = vld [vmem:[#allocation2 + $0xc] sm:$0xf]
    %v78 = vld [vmem:[#allocation2 + $0x10] sm:$0xf]
    %v79 = vld [vmem:[#allocation2 + $0x14] sm:$0xf]
    %v80 = vld [vmem:[#allocation2 + $0x18] sm:$0xf]
    %v81 = vld [vmem:[#allocation2 + $0x1c] sm:$0xf]
    %v82 = vld [vmem:[#allocation2 + $0x20] sm:$0xf]
    %v83 = vld [vmem:[#allocation2 + $0x24] sm:$0xf]
    %v84 = vld [vmem:[#allocation2 + $0x28] sm:$0xf]
    %v85 = vld [vmem:[#allocation2 + $0x2c] sm:$0xf]
    %v86 = vld [vmem:[#allocation2 + $0x30] sm:$0xf]
    %v87 = vld [vmem:[#allocation2 + $0x34] sm:$0xf]
    %v88 = vld [vmem:[#allocation2 + $0x38] sm:$0xf]
    %v89 = vld [vmem:[#allocation2 + $0x3c] sm:$0xf]
    %v106 = vunpack.c.l.b16 %v74
    %v107 = vunpack.c.l.b16 %v75
    %v108 = vunpack.c.l.b16 %v76
    %v109 = vunpack.c.l.b16 %v77
    %v110 = vunpack.c.l.b16 %v78
    %v111 = vunpack.c.l.b16 %v79
    %v112 = vunpack.c.l.b16 %v80
    %v113 = vunpack.c.l.b16 %v81
    %v114 = vunpack.c.l.b16 %v82
    %v115 = vunpack.c.l.b16 %v83
    %v116 = vunpack.c.l.b16 %v84
    %v117 = vunpack.c.l.b16 %v85
    %v118 = vunpack.c.l.b16 %v86
    %v119 = vunpack.c.l.b16 %v87
    %v120 = vunpack.c.l.b16 %v88
    %v121 = vunpack.c.l.b16 %v89
    %v122 = vpack.c.b16 %v107, %v106
    %v123 = vpack.c.b16 %v109, %v108
    %v124 = vpack.c.b16 %v111, %v110
    %v125 = vpack.c.b16 %v113, %v112
    %v126 = vpack.c.b16 %v115, %v114
    %v127 = vpack.c.b16 %v117, %v116
    %v128 = vpack.c.b16 %v119, %v118
    %v129 = vpack.c.b16 %v121, %v120
    %138 = vmatprep.subr.bf16.mxu0 0
    %139 = vmatpush1.bf16.msra.mxu0 %v122
    %140 = vmatprep.subr.bf16.mxu0 0
    %141 = vmatpush1.bf16.msra.mxu0 %v123
    %142 = vmatprep.subr.bf16.mxu0 0
    %143 = vmatpush1.bf16.msra.mxu0 %v124
    %144 = vmatprep.subr.bf16.mxu0 0
    %145 = vmatpush1.bf16.msra.mxu0 %v125
    %146 = vmatprep.subr.bf16.mxu0 0
    %147 = vmatpush1.bf16.msra.mxu0 %v126
    %148 = vmatprep.subr.bf16.mxu0 0
    %149 = vmatpush1.bf16.msra.mxu0 %v127
    %150 = vmatprep.subr.bf16.mxu0 0
    %151 = vmatpush1.bf16.msra.mxu0 %v128
    %152 = vmatprep.subr.bf16.mxu0 0
    %153 = vmatpush1.bf16.msra.mxu0 %v129
    %154 = vmatprep.subr.bf16.mxu0 0
    %155 = vmatpush1.bf16.msra.mxu0 0
    %156 = vmatprep.subr.bf16.mxu0 0
    %157 = vmatpush1.bf16.msra.mxu0 0
    %158 = vmatprep.subr.bf16.mxu0 0
    %159 = vmatpush1.bf16.msra.mxu0 0
    %160 = vmatprep.subr.bf16.mxu0 0
    %161 = vmatpush1.bf16.msra.mxu0 0
    %162 = vmatprep.subr.bf16.mxu0 0
    %163 = vmatpush1.bf16.msra.mxu0 0
    %164 = vmatprep.subr.bf16.mxu0 0
    %165 = vmatpush1.bf16.msra.mxu0 0
    %166 = vmatprep.subr.bf16.mxu0 0
    %167 = vmatpush1.bf16.msra.mxu0 0
    %168 = vmatprep.subr.bf16.mxu0 0
    %169 = vmatpush1.bf16.msra.mxu0 0
    %170 = vmatprep.mubr.bf16.mxu0 0
    %171 = vmatmul.mubr.bf16.gmra.mrb[0].mxu0 %v70
    %v172 = vpop.f32.mrb[0].mxu0
    %v173 = vadd.f32 0.0, %v172
    %v174 = vpop.f32.mrb[0].mxu0
    %v175 = vpop.f32.mrb[0].mxu0
    %v176 = vpop.f32.mrb[0].mxu0
    %177 = vdwg.mxu0
    %v178 = vadd.f32 %v73, %v173
    %179 = vst [vmem:[#allocation7] sm:$0xff] %v178
    %v180 = vunpack.c.l.bf16 %v70
    %v182 = vlaneseq
    %v183 = vshrl.u32 %v182, 7
    %v184 = vsub.s32 0, %v183
    %v185 = vrot.slane %v72, %v184
    %v187 = vmul.f32 %v180, %v185
    %v188 = vpack.c.bf16 %v187, %v187
    %v189 = vld [vmem:[#allocation7] sm:$0xff]
    %v190 = vld [vmem:[#allocation5] sm:$0xf]
    %v191 = vld [vmem:[#allocation5 + $0x4] sm:$0xf]
    %v192 = vld [vmem:[#allocation5 + $0x8] sm:$0xf]
    %v193 = vld [vmem:[#allocation5 + $0xc] sm:$0xf]
    %v194 = vld [vmem:[#allocation5 + $0x10] sm:$0xf]
    %v195 = vld [vmem:[#allocation5 + $0x14] sm:$0xf]
    %v196 = vld [vmem:[#allocation5 + $0x18] sm:$0xf]
    %v197 = vld [vmem:[#allocation5 + $0x1c] sm:$0xf]
    %v198 = vld [vmem:[#allocation5 + $0x20] sm:$0xf]
    %v199 = vld [vmem:[#allocation5 + $0x24] sm:$0xf]
    %v200 = vld [vmem:[#allocation5 + $0x28] sm:$0xf]
    %v201 = vld [vmem:[#allocation5 + $0x2c] sm:$0xf]
    %v202 = vld [vmem:[#allocation5 + $0x30] sm:$0xf]
    %v203 = vld [vmem:[#allocation5 + $0x34] sm:$0xf]
    %v204 = vld [vmem:[#allocation5 + $0x38] sm:$0xf]
    %v205 = vld [vmem:[#allocation5 + $0x3c] sm:$0xf]
    %v222 = vunpack.c.l.b16 %v190
    %v223 = vunpack.c.l.b16 %v191
    %v224 = vunpack.c.l.b16 %v192
    %v225 = vunpack.c.l.b16 %v193
    %v226 = vunpack.c.l.b16 %v194
    %v227 = vunpack.c.l.b16 %v195
    %v228 = vunpack.c.l.b16 %v196
    %v229 = vunpack.c.l.b16 %v197
    %v230 = vunpack.c.l.b16 %v198
    %v231 = vunpack.c.l.b16 %v199
    %v232 = vunpack.c.l.b16 %v200
    %v233 = vunpack.c.l.b16 %v201
    %v234 = vunpack.c.l.b16 %v202
    %v235 = vunpack.c.l.b16 %v203
    %v236 = vunpack.c.l.b16 %v204
    %v237 = vunpack.c.l.b16 %v205
    %v238 = vpack.c.b16 %v223, %v222
    %v239 = vpack.c.b16 %v225, %v224
    %v240 = vpack.c.b16 %v227, %v226
    %v241 = vpack.c.b16 %v229, %v228
    %v242 = vpack.c.b16 %v231, %v230
    %v243 = vpack.c.b16 %v233, %v232
    %v244 = vpack.c.b16 %v235, %v234
    %v245 = vpack.c.b16 %v237, %v236
    %254 = vmatprep.subr.bf16.mxu0 0
    %255 = vmatpush1.bf16.msra.mxu0 %v238
    %256 = vmatprep.subr.bf16.mxu0 0
    %257 = vmatpush1.bf16.msra.mxu0 %v239
    %258 = vmatprep.subr.bf16.mxu0 0
    %259 = vmatpush1.bf16.msra.mxu0 %v240
    %260 = vmatprep.subr.bf16.mxu0 0
    %261 = vmatpush1.bf16.msra.mxu0 %v241
    %262 = vmatprep.subr.bf16.mxu0 0
    %263 = vmatpush1.bf16.msra.mxu0 %v242
    %264 = vmatprep.subr.bf16.mxu0 0
    %265 = vmatpush1.bf16.msra.mxu0 %v243
    %266 = vmatprep.subr.bf16.mxu0 0
    %267 = vmatpush1.bf16.msra.mxu0 %v244
    %268 = vmatprep.subr.bf16.mxu0 0
    %269 = vmatpush1.bf16.msra.mxu0 %v245
    %270 = vmatprep.subr.bf16.mxu0 0
    %271 = vmatpush1.bf16.msra.mxu0 0
    %272 = vmatprep.subr.bf16.mxu0 0
    %273 = vmatpush1.bf16.msra.mxu0 0
    %274 = vmatprep.subr.bf16.mxu0 0
    %275 = vmatpush1.bf16.msra.mxu0 0
    %276 = vmatprep.subr.bf16.mxu0 0
    %277 = vmatpush1.bf16.msra.mxu0 0
    %278 = vmatprep.subr.bf16.mxu0 0
    %279 = vmatpush1.bf16.msra.mxu0 0
    %280 = vmatprep.subr.bf16.mxu0 0
    %281 = vmatpush1.bf16.msra.mxu0 0
    %282 = vmatprep.subr.bf16.mxu0 0
    %283 = vmatpush1.bf16.msra.mxu0 0
    %284 = vmatprep.subr.bf16.mxu0 0
    %285 = vmatpush1.bf16.msra.mxu0 0
    %286 = vmatprep.mubr.bf16.mxu0 0
    %287 = vmatmul.mubr.bf16.gmra.mrb[0].mxu0 %v188
    %v288 = vpop.f32.mrb[0].mxu0
    %v289 = vadd.f32 0.0, %v288
    %v290 = vpop.f32.mrb[0].mxu0
    %v291 = vpop.f32.mrb[0].mxu0
    %v292 = vpop.f32.mrb[0].mxu0
    %293 = vdwg.mxu0
    %v294 = vld [vmem:[%s4] sm:$0x1]
    %v296 = vlaneseq
    %v297 = vshrl.u32 %v296, 7
    %v298 = vsub.s32 0, %v297
    %v299 = vrot.slane %v294, %v298
    %v301 = vmul.f32 %v289, %v299
    %v302 = vadd.f32 %v189, %v301
    %303 = vst [vmem:[#allocation7] sm:$0xff] %v302
    // Predicated region
    $region38: #{noisy_linear.1} parent=1 // pred_check
      _
    $region39: #{noisy_linear.1} parent=1 // pred_check_branch
      %305 = sbr.rel (0) target = $region41
    $region40: #{noisy_linear.1} parent=1 // pred_region
      %s307 = ssub.s32 128, 128
      %308 = vsyncadd [#allocation4], %s307
      %s310 = sshll.u32 [#allocation7], 4
      %s311 = int_to_ptr.vmem [resolvable:$true] %s310
      %313 = dma.vmem_to_hbm [thread:$0]  %s311, 128, %s6, [#allocation4]
    $region41: #{noisy_linear.1} parent=1 // pred_fallthru
      _
    // Predicated region
    $region42: #{noisy_linear.1} parent=1 // pred_check
      _
    $region43: #{noisy_linear.1} parent=1 // pred_check_branch
      %315 = sbr.rel (0) target = $region45
    $region44: #{noisy_linear.1} parent=1 // pred_region
      %316 = dma.done [#allocation4], 128
    $region45: #{noisy_linear.1} parent=1 // pred_fallthru
      _
    %317 = vsyncpa [#allocation3], 1
    %318 = vsyncpa [#allocation6], 1
    %319 = vsyncpa [#allocation4], 1

</llo_original>
